<compile_context>
chip_gen: v7x
topology: tpu7x:2x2x1
jax: 0.10.0
libtpu: 0.0.40
codegen_flags: <defaults>
</compile_context>

<pallas_src>
import functools

import jax
import jax.numpy as jnp
from jax import lax
from jax.experimental import pallas as pl
from jax.experimental.pallas import tpu as pltpu

HIDDEN_SIZE = 20
INPUT_SIZE = 10
OUTPUT_SIZE = 5


def rnn_fc_kernel(xw_ref, whh_ref, wfc_ref, bfc_ref, out_ref, hs_ref, *, T, B):
    """Serial tanh recurrence + single post-loop FC matmul.

    xw_ref  : (T*B, H)  precomputed x @ W_ih^T + (b_ih + b_hh), time-major rows
                        (row t*B + b corresponds to timestep t, batch b)
    whh_ref : (H, H)    hidden->hidden weights (transposed vs. PyTorch)
    wfc_ref : (H, O)    fc weights (transposed vs. PyTorch)
    bfc_ref : (1, O)    fc bias
    out_ref : (T*B, O)  time-major flattened output
    hs_ref  : (T*B, H)  VMEM scratch collecting all hidden states
    """
    whh = whh_ref[...]                       # hoist loop-invariant load
    H = whh.shape[0]

    def step(t, h):
        row = t * B
        pre = xw_ref[pl.ds(row, B), :] + jnp.dot(
            h, whh, preferred_element_type=jnp.float32)
        h_new = jnp.tanh(pre)                # (B, H)
        hs_ref[pl.ds(row, B), :] = h_new
        return h_new

    h0 = jnp.zeros((B, H), jnp.float32)
    # T is static and small -> fully unroll so adjacent steps can interleave.
    lax.fori_loop(0, T, step, h0, unroll=True)

    # Single batched FC + one lane-dense bulk store instead of T narrow stores.
    out_ref[...] = (jnp.dot(hs_ref[...], wfc_ref[...],
                            preferred_element_type=jnp.float32)
                    + bfc_ref[...])


def target_rnn_forward(x, params):
    """x: (B, T, I) batch-first, like the PyTorch module. Returns (B, T, O)."""
    w_ih = params["w_ih"].astype(jnp.float32)   # (H, I)
    w_hh = params["w_hh"].astype(jnp.float32)   # (H, H)
    b_ih = params["b_ih"].astype(jnp.float32)   # (H,)
    b_hh = params["b_hh"].astype(jnp.float32)   # (H,)
    w_fc = params["w_fc"].astype(jnp.float32)   # (O, H)
    b_fc = params["b_fc"].astype(jnp.float32)   # (O,)

    B, T, I = x.shape
    H = w_ih.shape[0]
    O = w_fc.shape[0]

    # Hoisted input projection: one einsum consumes batch-first x directly and
    # emits time-major xW with both RNN biases folded in (no per-step bias
    # broadcast, no explicit transpose pass over x).
    xw = jnp.einsum("bti,hi->tbh", x.astype(jnp.float32), w_ih,
                    preferred_element_type=jnp.float32) + (b_ih + b_hh)
    xw = xw.reshape(T * B, H)                    # row t*B + b

    whh_t = w_hh.T                               # (H, H)
    wfc_t = w_fc.T                               # (H, O)
    bfc = b_fc.reshape(1, O)                     # (1, O)

    kernel = functools.partial(rnn_fc_kernel, T=T, B=B)

    grid_spec = pltpu.PrefetchScalarGridSpec(
        num_scalar_prefetch=0,
        grid=(1,),
        in_specs=[
            pl.BlockSpec((T * B, H), lambda i: (0, 0)),
            pl.BlockSpec((H, H), lambda i: (0, 0)),
            pl.BlockSpec((H, O), lambda i: (0, 0)),
            pl.BlockSpec((1, O), lambda i: (0, 0)),
        ],
        out_specs=pl.BlockSpec((T * B, O), lambda i: (0, 0)),
        scratch_shapes=[pltpu.VMEM((T * B, H), jnp.float32)],
    )

    out_flat = pl.pallas_call(
        kernel,
        out_shape=jax.ShapeDtypeStruct((T * B, O), jnp.float32),
        grid_spec=grid_spec,
        compiler_params=pltpu.CompilerParams(
            dimension_semantics=("arbitrary",)),
    )(xw, whh_t, wfc_t, bfc)

    # TODO(synk): if T*B is ever scaled up, chunk the T axis with a grid and
    # carry the hidden state in scratch instead of keeping everything resident.
    return jnp.transpose(out_flat.reshape(T, B, O), (1, 0, 2))   # (B, T, O)


def reference_forward(x, params):
    """Pure-JAX reference matching PyTorch nn.RNN(tanh, batch_first) + Linear."""
    w_ih, w_hh, b_ih, b_hh, w_fc, b_fc = (
        params["w_ih"], params["w_hh"], params["b_ih"],
        params["b_hh"], params["w_fc"], params["b_fc"])
    B, T, I = x.shape
    H = w_ih.shape[0]

    def step(h, x_t):
        h_new = jnp.tanh(x_t @ w_ih.T + b_ih + h @ w_hh.T + b_hh)
        return h_new, h_new

    h0 = jnp.zeros((B, H), jnp.float32)
    _, hs = lax.scan(step, h0, jnp.transpose(x, (1, 0, 2)))      # (T, B, H)
    hs = jnp.transpose(hs, (1, 0, 2))                            # (B, T, H)
    return hs @ w_fc.T + b_fc


def init_params(key):
    """Deterministic init mimicking PyTorch's U(-1/sqrt(H), 1/sqrt(H))."""
    ks = jax.random.split(key, 6)
    bound = 1.0 / jnp.sqrt(jnp.float32(HIDDEN_SIZE))
    u = lambda k, shape: jax.random.uniform(k, shape, jnp.float32, -bound, bound)
    return {
        "w_ih": u(ks[0], (HIDDEN_SIZE, INPUT_SIZE)),
        "w_hh": u(ks[1], (HIDDEN_SIZE, HIDDEN_SIZE)),
        "b_ih": u(ks[2], (HIDDEN_SIZE,)),
        "b_hh": u(ks[3], (HIDDEN_SIZE,)),
        "w_fc": u(ks[4], (OUTPUT_SIZE, HIDDEN_SIZE)),
        "b_fc": u(ks[5], (OUTPUT_SIZE,)),
    }


if __name__ == "__main__":
    key = jax.random.PRNGKey(0)
    k_param, k_x = jax.random.split(key)

    params = init_params(k_param)

    # batch=8 fills all 8 vreg sublanes of the (B, H) hidden state.
    batch, seq = 8, 8
    x = jax.random.normal(k_x, (batch, seq, INPUT_SIZE), jnp.float32)

    out = jax.block_until_ready(target_rnn_forward(x, params))
    ref = jax.block_until_ready(reference_forward(x, params))

    assert out.shape == (batch, seq, OUTPUT_SIZE)
    assert jnp.allclose(out, ref, atol=1e-5, rtol=1e-5)

    print("KERNEL_OK")
</pallas_src>

<mosaic_0001>
module attributes {stable_mosaic.version = 11 : i64} {
  func.func @rnn_fc_kernel(%arg0: i32, %arg1: memref<64x20xf32, #tpu.memory_space<vmem>>, %arg2: memref<20x20xf32, #tpu.memory_space<vmem>>, %arg3: memref<20x5xf32, #tpu.memory_space<vmem>>, %arg4: memref<1x5xf32, #tpu.memory_space<vmem>>, %arg5: memref<64x5xf32, #tpu.memory_space<vmem>>, %arg6: memref<64x20xf32, #tpu.memory_space<vmem>>) attributes {dimension_semantics = [#tpu.dimension_semantics<arbitrary>], iteration_bounds = array<i64: 1>, scalar_prefetch = 0 : i64, scratch_operands = 1 : i64, tpu.core_type = #tpu.core_type<tc>, window_params = [{pipeline_mode = #tpu.pipeline_mode<synchronous>, transform_indices = @transform_0, window_bounds = array<i64: 64, 20>}, {pipeline_mode = #tpu.pipeline_mode<synchronous>, transform_indices = @transform_1, window_bounds = array<i64: 20, 20>}, {pipeline_mode = #tpu.pipeline_mode<synchronous>, transform_indices = @transform_2, window_bounds = array<i64: 20, 5>}, {pipeline_mode = #tpu.pipeline_mode<synchronous>, transform_indices = @transform_3, window_bounds = array<i64: 1, 5>}, {pipeline_mode = #tpu.pipeline_mode<synchronous>, transform_indices = @transform_4, window_bounds = array<i64: 64, 5>}]} {
    %c0 = arith.constant 0 : index
    %c0_0 = arith.constant 0 : index
    %0 = vector.load %arg2[%c0, %c0_0] : memref<20x20xf32, #tpu.memory_space<vmem>>, vector<20x20xf32>
    %cst = arith.constant 0.000000e+00 : f32
    %1 = vector.broadcast %cst : f32 to vector<8x20xf32>
    %c0_i32 = arith.constant 0 : i32
    %c8_i32 = arith.constant 8 : i32
    %2 = arith.muli %c0_i32, %c8_i32 : i32
    %3 = arith.index_cast %2 : i32 to index
    %c0_1 = arith.constant 0 : index
    %4 = vector.load %arg1[%3, %c0_1] : memref<64x20xf32, #tpu.memory_space<vmem>>, vector<8x20xf32>
    %cst_2 = arith.constant dense<0.000000e+00> : vector<8x20xf32>
    %5 = tpu.matmul %1, %0, %cst_2 {dimension_numbers = #tpu.dot_dimension_numbers<[1], [0], [0], [1], [0, 0, 1, 1], [], []>} : vector<8x20xf32>, vector<20x20xf32>, vector<8x20xf32> -> vector<8x20xf32>
    %6 = arith.addf %4, %5 : vector<8x20xf32>
    %7 = math.tanh %6 : vector<8x20xf32>
    %8 = arith.index_cast %2 : i32 to index
    %c0_3 = arith.constant 0 : index
    %9 = vector.load %arg6[%8, %c0_3] : memref<64x20xf32, #tpu.memory_space<vmem>>, vector<8x20xf32>
    tpu.vector_store %arg6[%8, %c0_3], %7 {strides = array<i32>} : memref<64x20xf32, #tpu.memory_space<vmem>>, vector<8x20xf32>,
    %c1_i32 = arith.constant 1 : i32
    %c8_i32_4 = arith.constant 8 : i32
    %10 = arith.muli %c1_i32, %c8_i32_4 : i32
    %11 = arith.index_cast %10 : i32 to index
    %c0_5 = arith.constant 0 : index
    %12 = vector.load %arg1[%11, %c0_5] : memref<64x20xf32, #tpu.memory_space<vmem>>, vector<8x20xf32>
    %cst_6 = arith.constant dense<0.000000e+00> : vector<8x20xf32>
    %13 = tpu.matmul %7, %0, %cst_6 {dimension_numbers = #tpu.dot_dimension_numbers<[1], [0], [0], [1], [0, 0, 1, 1], [], []>} : vector<8x20xf32>, vector<20x20xf32>, vector<8x20xf32> -> vector<8x20xf32>
    %14 = arith.addf %12, %13 : vector<8x20xf32>
    %15 = math.tanh %14 : vector<8x20xf32>
    %16 = arith.index_cast %10 : i32 to index
    %c0_7 = arith.constant 0 : index
    %17 = vector.load %arg6[%16, %c0_7] : memref<64x20xf32, #tpu.memory_space<vmem>>, vector<8x20xf32>
    tpu.vector_store %arg6[%16, %c0_7], %15 {strides = array<i32>} : memref<64x20xf32, #tpu.memory_space<vmem>>, vector<8x20xf32>,
    %c2_i32 = arith.constant 2 : i32
    %c8_i32_8 = arith.constant 8 : i32
    %18 = arith.muli %c2_i32, %c8_i32_8 : i32
    %19 = arith.index_cast %18 : i32 to index
    %c0_9 = arith.constant 0 : index
    %20 = vector.load %arg1[%19, %c0_9] : memref<64x20xf32, #tpu.memory_space<vmem>>, vector<8x20xf32>
    %cst_10 = arith.constant dense<0.000000e+00> : vector<8x20xf32>
    %21 = tpu.matmul %15, %0, %cst_10 {dimension_numbers = #tpu.dot_dimension_numbers<[1], [0], [0], [1], [0, 0, 1, 1], [], []>} : vector<8x20xf32>, vector<20x20xf32>, vector<8x20xf32> -> vector<8x20xf32>
    %22 = arith.addf %20, %21 : vector<8x20xf32>
    %23 = math.tanh %22 : vector<8x20xf32>
    %24 = arith.index_cast %18 : i32 to index
    %c0_11 = arith.constant 0 : index
    %25 = vector.load %arg6[%24, %c0_11] : memref<64x20xf32, #tpu.memory_space<vmem>>, vector<8x20xf32>
    tpu.vector_store %arg6[%24, %c0_11], %23 {strides = array<i32>} : memref<64x20xf32, #tpu.memory_space<vmem>>, vector<8x20xf32>,
    %c3_i32 = arith.constant 3 : i32
    %c8_i32_12 = arith.constant 8 : i32
    %26 = arith.muli %c3_i32, %c8_i32_12 : i32
    %27 = arith.index_cast %26 : i32 to index
    %c0_13 = arith.constant 0 : index
    %28 = vector.load %arg1[%27, %c0_13] : memref<64x20xf32, #tpu.memory_space<vmem>>, vector<8x20xf32>
    %cst_14 = arith.constant dense<0.000000e+00> : vector<8x20xf32>
    %29 = tpu.matmul %23, %0, %cst_14 {dimension_numbers = #tpu.dot_dimension_numbers<[1], [0], [0], [1], [0, 0, 1, 1], [], []>} : vector<8x20xf32>, vector<20x20xf32>, vector<8x20xf32> -> vector<8x20xf32>
    %30 = arith.addf %28, %29 : vector<8x20xf32>
    %31 = math.tanh %30 : vector<8x20xf32>
    %32 = arith.index_cast %26 : i32 to index
    %c0_15 = arith.constant 0 : index
    %33 = vector.load %arg6[%32, %c0_15] : memref<64x20xf32, #tpu.memory_space<vmem>>, vector<8x20xf32>
    tpu.vector_store %arg6[%32, %c0_15], %31 {strides = array<i32>} : memref<64x20xf32, #tpu.memory_space<vmem>>, vector<8x20xf32>,
    %c4_i32 = arith.constant 4 : i32
    %c8_i32_16 = arith.constant 8 : i32
    %34 = arith.muli %c4_i32, %c8_i32_16 : i32
    %35 = arith.index_cast %34 : i32 to index
    %c0_17 = arith.constant 0 : index
    %36 = vector.load %arg1[%35, %c0_17] : memref<64x20xf32, #tpu.memory_space<vmem>>, vector<8x20xf32>
    %cst_18 = arith.constant dense<0.000000e+00> : vector<8x20xf32>
    %37 = tpu.matmul %31, %0, %cst_18 {dimension_numbers = #tpu.dot_dimension_numbers<[1], [0], [0], [1], [0, 0, 1, 1], [], []>} : vector<8x20xf32>, vector<20x20xf32>, vector<8x20xf32> -> vector<8x20xf32>
    %38 = arith.addf %36, %37 : vector<8x20xf32>
    %39 = math.tanh %38 : vector<8x20xf32>
    %40 = arith.index_cast %34 : i32 to index
    %c0_19 = arith.constant 0 : index
    %41 = vector.load %arg6[%40, %c0_19] : memref<64x20xf32, #tpu.memory_space<vmem>>, vector<8x20xf32>
    tpu.vector_store %arg6[%40, %c0_19], %39 {strides = array<i32>} : memref<64x20xf32, #tpu.memory_space<vmem>>, vector<8x20xf32>,
    %c5_i32 = arith.constant 5 : i32
    %c8_i32_20 = arith.constant 8 : i32
    %42 = arith.muli %c5_i32, %c8_i32_20 : i32
    %43 = arith.index_cast %42 : i32 to index
    %c0_21 = arith.constant 0 : index
    %44 = vector.load %arg1[%43, %c0_21] : memref<64x20xf32, #tpu.memory_space<vmem>>, vector<8x20xf32>
    %cst_22 = arith.constant dense<0.000000e+00> : vector<8x20xf32>
    %45 = tpu.matmul %39, %0, %cst_22 {dimension_numbers = #tpu.dot_dimension_numbers<[1], [0], [0], [1], [0, 0, 1, 1], [], []>} : vector<8x20xf32>, vector<20x20xf32>, vector<8x20xf32> -> vector<8x20xf32>
    %46 = arith.addf %44, %45 : vector<8x20xf32>
    %47 = math.tanh %46 : vector<8x20xf32>
    %48 = arith.index_cast %42 : i32 to index
    %c0_23 = arith.constant 0 : index
    %49 = vector.load %arg6[%48, %c0_23] : memref<64x20xf32, #tpu.memory_space<vmem>>, vector<8x20xf32>
    tpu.vector_store %arg6[%48, %c0_23], %47 {strides = array<i32>} : memref<64x20xf32, #tpu.memory_space<vmem>>, vector<8x20xf32>,
    %c6_i32 = arith.constant 6 : i32
    %c8_i32_24 = arith.constant 8 : i32
    %50 = arith.muli %c6_i32, %c8_i32_24 : i32
    %51 = arith.index_cast %50 : i32 to index
    %c0_25 = arith.constant 0 : index
    %52 = vector.load %arg1[%51, %c0_25] : memref<64x20xf32, #tpu.memory_space<vmem>>, vector<8x20xf32>
    %cst_26 = arith.constant dense<0.000000e+00> : vector<8x20xf32>
    %53 = tpu.matmul %47, %0, %cst_26 {dimension_numbers = #tpu.dot_dimension_numbers<[1], [0], [0], [1], [0, 0, 1, 1], [], []>} : vector<8x20xf32>, vector<20x20xf32>, vector<8x20xf32> -> vector<8x20xf32>
    %54 = arith.addf %52, %53 : vector<8x20xf32>
    %55 = math.tanh %54 : vector<8x20xf32>
    %56 = arith.index_cast %50 : i32 to index
    %c0_27 = arith.constant 0 : index
    %57 = vector.load %arg6[%56, %c0_27] : memref<64x20xf32, #tpu.memory_space<vmem>>, vector<8x20xf32>
    tpu.vector_store %arg6[%56, %c0_27], %55 {strides = array<i32>} : memref<64x20xf32, #tpu.memory_space<vmem>>, vector<8x20xf32>,
    %c7_i32 = arith.constant 7 : i32
    %c8_i32_28 = arith.constant 8 : i32
    %58 = arith.muli %c7_i32, %c8_i32_28 : i32
    %59 = arith.index_cast %58 : i32 to index
    %c0_29 = arith.constant 0 : index
    %60 = vector.load %arg1[%59, %c0_29] : memref<64x20xf32, #tpu.memory_space<vmem>>, vector<8x20xf32>
    %cst_30 = arith.constant dense<0.000000e+00> : vector<8x20xf32>
    %61 = tpu.matmul %55, %0, %cst_30 {dimension_numbers = #tpu.dot_dimension_numbers<[1], [0], [0], [1], [0, 0, 1, 1], [], []>} : vector<8x20xf32>, vector<20x20xf32>, vector<8x20xf32> -> vector<8x20xf32>
    %62 = arith.addf %60, %61 : vector<8x20xf32>
    %63 = math.tanh %62 : vector<8x20xf32>
    %64 = arith.index_cast %58 : i32 to index
    %c0_31 = arith.constant 0 : index
    %65 = vector.load %arg6[%64, %c0_31] : memref<64x20xf32, #tpu.memory_space<vmem>>, vector<8x20xf32>
    tpu.vector_store %arg6[%64, %c0_31], %63 {strides = array<i32>} : memref<64x20xf32, #tpu.memory_space<vmem>>, vector<8x20xf32>,
    %c8_i32_32 = arith.constant 8 : i32
    %c0_33 = arith.constant 0 : index
    %c0_34 = arith.constant 0 : index
    %66 = vector.load %arg6[%c0_33, %c0_34] : memref<64x20xf32, #tpu.memory_space<vmem>>, vector<64x20xf32>
    %c0_35 = arith.constant 0 : index
    %c0_36 = arith.constant 0 : index
    %67 = vector.load %arg3[%c0_35, %c0_36] : memref<20x5xf32, #tpu.memory_space<vmem>>, vector<20x5xf32>
    %cst_37 = arith.constant dense<0.000000e+00> : vector<64x5xf32>
    %68 = tpu.matmul %66, %67, %cst_37 {dimension_numbers = #tpu.dot_dimension_numbers<[1], [0], [0], [1], [0, 0, 1, 1], [], []>} : vector<64x20xf32>, vector<20x5xf32>, vector<64x5xf32> -> vector<64x5xf32>
    %c0_38 = arith.constant 0 : index
    %c0_39 = arith.constant 0 : index
    %69 = vector.load %arg4[%c0_38, %c0_39] : memref<1x5xf32, #tpu.memory_space<vmem>>, vector<1x5xf32>
    %70 = vector.broadcast %69 : vector<1x5xf32> to vector<64x5xf32>
    %71 = arith.addf %68, %70 : vector<64x5xf32>
    %c0_40 = arith.constant 0 : index
    %c0_41 = arith.constant 0 : index
    %72 = vector.load %arg5[%c0_40, %c0_41] : memref<64x5xf32, #tpu.memory_space<vmem>>, vector<64x5xf32>
    tpu.vector_store %arg5[%c0_40, %c0_41], %71 {strides = array<i32>} : memref<64x5xf32, #tpu.memory_space<vmem>>, vector<64x5xf32>,
    return
  }
  func.func @transform_0(%arg0: i32) -> (i32, i32) {
    %c0_i32 = arith.constant 0 : i32
    %c0_i32_0 = arith.constant 0 : i32
    %c0_i32_1 = arith.constant 0 : i32
    return %c0_i32, %c0_i32_0 : i32, i32
  }
  func.func @transform_1(%arg0: i32) -> (i32, i32) {
    %c0_i32 = arith.constant 0 : i32
    %c0_i32_0 = arith.constant 0 : i32
    %c0_i32_1 = arith.constant 0 : i32
    return %c0_i32, %c0_i32_0 : i32, i32
  }
  func.func @transform_2(%arg0: i32) -> (i32, i32) {
    %c0_i32 = arith.constant 0 : i32
    %c0_i32_0 = arith.constant 0 : i32
    %c0_i32_1 = arith.constant 0 : i32
    return %c0_i32, %c0_i32_0 : i32, i32
  }
  func.func @transform_3(%arg0: i32) -> (i32, i32) {
    %c0_i32 = arith.constant 0 : i32
    %c0_i32_0 = arith.constant 0 : i32
    %c0_i32_1 = arith.constant 0 : i32
    return %c0_i32, %c0_i32_0 : i32, i32
  }
  func.func @transform_4(%arg0: i32) -> (i32, i32) {
    %c0_i32 = arith.constant 0 : i32
    %c0_i32_0 = arith.constant 0 : i32
    %c0_i32_1 = arith.constant 0 : i32
    return %c0_i32, %c0_i32_0 : i32, i32
  }
}

</mosaic_0001>

<llo_original>
// kernel: tpu_custom_call.1
$region0: #{tpu_custom_call.1}
  #allocation0 [shape = 'u32[]', space=smem, size = 0x4, offset = 0x4, fixed_abs, tag = 'smem constant byte address 0x4 - core index']
  #allocation1 [shape = 'u32[144,128]{1,0:T(1,128)}', space=vmem, size = 0x12000, scoped, tag = 'internal scratch']
  #allocation2 [shape = 'f32[64,20]{1,0:T(8,128)}', space=vmem, size = 0x8000, scoped, tag = 'scratch operand']
  %s0 = inlined_call_operand.vmem [shape: f32[64,20], index: 0, kind: input, shape index: {}]
  %s1 = inlined_call_operand.vmem [shape: f32[20,20], index: 1, kind: input, shape index: {}]
  %s2 = inlined_call_operand.vmem [shape: f32[20,5], index: 2, kind: input, shape index: {}]
  %s3 = inlined_call_operand.vmem [shape: f32[1,5], index: 3, kind: input, shape index: {}]
  %s4 = inlined_call_operand.vmem [shape: f32[64,5], index: 4, kind: output, shape index: {}]
  %s5 = sld [smem:[#allocation0]]
  $region26: #{tpu_custom_call.1} parent=0
    _
  %s7 = ssub.s32 1, %s5
  %s8 = scalar_select 0, %s7, %s5
  // Predicated region
  $region2: #{tpu_custom_call.1} parent=0 // pred_check
    _
  $region3: #{tpu_custom_call.1} parent=0 // pred_check_branch
    %10 = sbr.rel (0) target = $region5
  $region4: #{tpu_custom_call.1} parent=0 // pred_region
    _
  $region5: #{tpu_custom_call.1} parent=0 // pred_fallthru
    _
  // Predicated region
  $region6: #{tpu_custom_call.1} parent=0 // pred_check
    _
  $region7: #{tpu_custom_call.1} parent=0 // pred_check_branch
    %12 = sbr.rel (0) target = $region9
  $region8: #{tpu_custom_call.1} parent=0 // pred_region
    _
  $region9: #{tpu_custom_call.1} parent=0 // pred_fallthru
    _
  // Predicated region
  $region10: #{tpu_custom_call.1} parent=0 // pred_check
    _
  $region11: #{tpu_custom_call.1} parent=0 // pred_check_branch
    %14 = sbr.rel (0) target = $region13
  $region12: #{tpu_custom_call.1} parent=0 // pred_region
    _
  $region13: #{tpu_custom_call.1} parent=0 // pred_fallthru
    _
  // Predicated region
  $region14: #{tpu_custom_call.1} parent=0 // pred_check
    _
  $region15: #{tpu_custom_call.1} parent=0 // pred_check_branch
    %16 = sbr.rel (0) target = $region17
  $region16: #{tpu_custom_call.1} parent=0 // pred_region
    _
  $region17: #{tpu_custom_call.1} parent=0 // pred_fallthru
    _
  %v17 = vld [vmem:[%s1] sm:$0xff]
  %v18 = vld [vmem:[%s1 + $0x8] sm:$0xff]
  %v19 = vld [vmem:[%s1 + $0x10] sm:$0xf]
  %v20 = vld [vmem:[%s0] sm:$0xff]
  %vm21 = vcmask 162816
  %v23 = vsel %vm21, 0.0, 0
  %vm25 = vcmask 1043456
  %v27 = vsel %vm25, %v19, 0
  %29 = vmatprep.subr.mxu0 0.0
  %30 = vmatpush1.msra.mxu0 %v17
  %31 = vmatprep.subr.mxu0 0.0
  %32 = vmatpush1.msra.mxu0 %v18
  %33 = vmatprep.subr.mxu0 0.0
  %34 = vmatpush1.msra.mxu0 %v27
  %35 = vmatprep.subr.mxu0 0.0
  %36 = vmatpush1.msra.mxu0 0.0
  %37 = vmatprep.subr.mxu0 0.0
  %38 = vmatpush1.msra.mxu0 0.0
  %39 = vmatprep.subr.mxu0 0.0
  %40 = vmatpush1.msra.mxu0 0.0
  %41 = vmatprep.subr.mxu0 0.0
  %42 = vmatpush1.msra.mxu0 0.0
  %43 = vmatprep.subr.mxu0 0.0
  %44 = vmatpush1.msra.mxu0 0.0
  %45 = vmatprep.subr.mxu0 0.0
  %46 = vmatpush1.msra.mxu0 0.0
  %47 = vmatprep.subr.mxu0 0.0
  %48 = vmatpush1.msra.mxu0 0.0
  %49 = vmatprep.subr.mxu0 0.0
  %50 = vmatpush1.msra.mxu0 0.0
  %51 = vmatprep.subr.mxu0 0.0
  %52 = vmatpush1.msra.mxu0 0.0
  %53 = vmatprep.subr.mxu0 0.0
  %54 = vmatpush1.msra.mxu0 0.0
  %55 = vmatprep.subr.mxu0 0.0
  %56 = vmatpush1.msra.mxu0 0.0
  %57 = vmatprep.subr.mxu0 0.0
  %58 = vmatpush1.msra.mxu0 0.0
  %59 = vmatprep.subr.mxu0 0.0
  %60 = vmatpush1.msra.mxu0 0.0
  %61 = vmatprep.subr.mxu0 0.0
  %62 = vmatpush1.msra.mxu0 0.0
  %63 = vmatprep.subr.mxu0 0.0
  %64 = vmatpush1.msra.mxu0 0.0
  %65 = vmatprep.subr.mxu0 0.0
  %66 = vmatpush1.msra.mxu0 0.0
  %67 = vmatprep.subr.mxu0 0.0
  %68 = vmatpush1.msra.mxu0 0.0
  %69 = vmatprep.subr.mxu0 0.0
  %70 = vmatpush1.msra.mxu0 0.0
  %71 = vmatprep.subr.mxu0 0.0
  %72 = vmatpush1.msra.mxu0 0.0
  %73 = vmatprep.subr.mxu0 0.0
  %74 = vmatpush1.msra.mxu0 0.0
  %75 = vmatprep.subr.mxu0 0.0
  %76 = vmatpush1.msra.mxu0 0.0
  %77 = vmatprep.subr.mxu0 0.0
  %78 = vmatpush1.msra.mxu0 0.0
  %79 = vmatprep.subr.mxu0 0.0
  %80 = vmatpush1.msra.mxu0 0.0
  %81 = vmatprep.subr.mxu0 0.0
  %82 = vmatpush1.msra.mxu0 0.0
  %83 = vmatprep.subr.mxu0 0.0
  %84 = vmatpush1.msra.mxu0 0.0
  %85 = vmatprep.subr.mxu0 0.0
  %86 = vmatpush1.msra.mxu0 0.0
  %87 = vmatprep.subr.mxu0 0.0
  %88 = vmatpush1.msra.mxu0 0.0
  %89 = vmatprep.subr.mxu0 0.0
  %90 = vmatpush1.msra.mxu0 0.0
  %91 = vmatprep.subr.mxu0 0.0
  %92 = vmatpush1.msra.mxu0 0.0
  %93 = vmatprep.mubr.f32.mxu0 0.0
  %94 = vmatmul.mubr.f32.gmra.mrb[0].mxu0 %v23
  %v95 = vpop.f32.mrb[0].mxu0
  %v96 = vadd.f32 0.0, %v95
  %v97 = vpop.f32.mrb[0].mxu0
  %98 = vdwg.mxu0
  %v99 = vadd.f32 %v20, %v96
  %v100 = vtanh.pop %v99
  %101 = vst.msk [vmem:[#allocation2] sm:$0xff] %vm21, %v100
  %v102 = vld [vmem:[%s0 + $0x8] sm:$0xff]
  %v104 = vsel %vm21, %v100, 0
  %106 = vmatprep.subr.mxu0 0.0
  %107 = vmatpush1.msra.mxu0 %v17
  %108 = vmatprep.subr.mxu0 0.0
  %109 = vmatpush1.msra.mxu0 %v18
  %110 = vmatprep.subr.mxu0 0.0
  %111 = vmatpush1.msra.mxu0 %v27
  %112 = vmatprep.subr.mxu0 0.0
  %113 = vmatpush1.msra.mxu0 0.0
  %114 = vmatprep.subr.mxu0 0.0
  %115 = vmatpush1.msra.mxu0 0.0
  %116 = vmatprep.subr.mxu0 0.0
  %117 = vmatpush1.msra.mxu0 0.0
  %118 = vmatprep.subr.mxu0 0.0
  %119 = vmatpush1.msra.mxu0 0.0
  %120 = vmatprep.subr.mxu0 0.0
  %121 = vmatpush1.msra.mxu0 0.0
  %122 = vmatprep.subr.mxu0 0.0
  %123 = vmatpush1.msra.mxu0 0.0
  %124 = vmatprep.subr.mxu0 0.0
  %125 = vmatpush1.msra.mxu0 0.0
  %126 = vmatprep.subr.mxu0 0.0
  %127 = vmatpush1.msra.mxu0 0.0
  %128 = vmatprep.subr.mxu0 0.0
  %129 = vmatpush1.msra.mxu0 0.0
  %130 = vmatprep.subr.mxu0 0.0
  %131 = vmatpush1.msra.mxu0 0.0
  %132 = vmatprep.subr.mxu0 0.0
  %133 = vmatpush1.msra.mxu0 0.0
  %134 = vmatprep.subr.mxu0 0.0
  %135 = vmatpush1.msra.mxu0 0.0
  %136 = vmatprep.subr.mxu0 0.0
  %137 = vmatpush1.msra.mxu0 0.0
  %138 = vmatprep.subr.mxu0 0.0
  %139 = vmatpush1.msra.mxu0 0.0
  %140 = vmatprep.subr.mxu0 0.0
  %141 = vmatpush1.msra.mxu0 0.0
  %142 = vmatprep.subr.mxu0 0.0
  %143 = vmatpush1.msra.mxu0 0.0
  %144 = vmatprep.subr.mxu0 0.0
  %145 = vmatpush1.msra.mxu0 0.0
  %146 = vmatprep.subr.mxu0 0.0
  %147 = vmatpush1.msra.mxu0 0.0
  %148 = vmatprep.subr.mxu0 0.0
  %149 = vmatpush1.msra.mxu0 0.0
  %150 = vmatprep.subr.mxu0 0.0
  %151 = vmatpush1.msra.mxu0 0.0
  %152 = vmatprep.subr.mxu0 0.0
  %153 = vmatpush1.msra.mxu0 0.0
  %154 = vmatprep.subr.mxu0 0.0
  %155 = vmatpush1.msra.mxu0 0.0
  %156 = vmatprep.subr.mxu0 0.0
  %157 = vmatpush1.msra.mxu0 0.0
  %158 = vmatprep.subr.mxu0 0.0
  %159 = vmatpush1.msra.mxu0 0.0
  %160 = vmatprep.subr.mxu0 0.0
  %161 = vmatpush1.msra.mxu0 0.0
  %162 = vmatprep.subr.mxu0 0.0
  %163 = vmatpush1.msra.mxu0 0.0
  %164 = vmatprep.subr.mxu0 0.0
  %165 = vmatpush1.msra.mxu0 0.0
  %166 = vmatprep.subr.mxu0 0.0
  %167 = vmatpush1.msra.mxu0 0.0
  %168 = vmatprep.subr.mxu0 0.0
  %169 = vmatpush1.msra.mxu0 0.0
  %170 = vmatprep.mubr.f32.mxu0 0.0
  %171 = vmatmul.mubr.f32.gmra.mrb[0].mxu0 %v104
  %v172 = vpop.f32.mrb[0].mxu0
  %v173 = vadd.f32 0.0, %v172
  %v174 = vpop.f32.mrb[0].mxu0
  %175 = vdwg.mxu0
  %v176 = vadd.f32 %v102, %v173
  %v177 = vtanh.pop %v176
  %178 = vst.msk [vmem:[#allocation2 + $0x8] sm:$0xff] %vm21, %v177
  %v179 = vld [vmem:[%s0 + $0x10] sm:$0xff]
  %v181 = vsel %vm21, %v177, 0
  %183 = vmatprep.subr.mxu0 0.0
  %184 = vmatpush1.msra.mxu0 %v17
  %185 = vmatprep.subr.mxu0 0.0
  %186 = vmatpush1.msra.mxu0 %v18
  %187 = vmatprep.subr.mxu0 0.0
  %188 = vmatpush1.msra.mxu0 %v27
  %189 = vmatprep.subr.mxu0 0.0
  %190 = vmatpush1.msra.mxu0 0.0
  %191 = vmatprep.subr.mxu0 0.0
  %192 = vmatpush1.msra.mxu0 0.0
  %193 = vmatprep.subr.mxu0 0.0
  %194 = vmatpush1.msra.mxu0 0.0
  %195 = vmatprep.subr.mxu0 0.0
  %196 = vmatpush1.msra.mxu0 0.0
  %197 = vmatprep.subr.mxu0 0.0
  %198 = vmatpush1.msra.mxu0 0.0
  %199 = vmatprep.subr.mxu0 0.0
  %200 = vmatpush1.msra.mxu0 0.0
  %201 = vmatprep.subr.mxu0 0.0
  %202 = vmatpush1.msra.mxu0 0.0
  %203 = vmatprep.subr.mxu0 0.0
  %204 = vmatpush1.msra.mxu0 0.0
  %205 = vmatprep.subr.mxu0 0.0
  %206 = vmatpush1.msra.mxu0 0.0
  %207 = vmatprep.subr.mxu0 0.0
  %208 = vmatpush1.msra.mxu0 0.0
  %209 = vmatprep.subr.mxu0 0.0
  %210 = vmatpush1.msra.mxu0 0.0
  %211 = vmatprep.subr.mxu0 0.0
  %212 = vmatpush1.msra.mxu0 0.0
  %213 = vmatprep.subr.mxu0 0.0
  %214 = vmatpush1.msra.mxu0 0.0
  %215 = vmatprep.subr.mxu0 0.0
  %216 = vmatpush1.msra.mxu0 0.0
  %217 = vmatprep.subr.mxu0 0.0
  %218 = vmatpush1.msra.mxu0 0.0
  %219 = vmatprep.subr.mxu0 0.0
  %220 = vmatpush1.msra.mxu0 0.0
  %221 = vmatprep.subr.mxu0 0.0
  %222 = vmatpush1.msra.mxu0 0.0
  %223 = vmatprep.subr.mxu0 0.0
  %224 = vmatpush1.msra.mxu0 0.0
  %225 = vmatprep.subr.mxu0 0.0
  %226 = vmatpush1.msra.mxu0 0.0
  %227 = vmatprep.subr.mxu0 0.0
  %228 = vmatpush1.msra.mxu0 0.0
  %229 = vmatprep.subr.mxu0 0.0
  %230 = vmatpush1.msra.mxu0 0.0
  %231 = vmatprep.subr.mxu0 0.0
  %232 = vmatpush1.msra.mxu0 0.0
  %233 = vmatprep.subr.mxu0 0.0
  %234 = vmatpush1.msra.mxu0 0.0
  %235 = vmatprep.subr.mxu0 0.0
  %236 = vmatpush1.msra.mxu0 0.0
  %237 = vmatprep.subr.mxu0 0.0
  %238 = vmatpush1.msra.mxu0 0.0
  %239 = vmatprep.subr.mxu0 0.0
  %240 = vmatpush1.msra.mxu0 0.0
  %241 = vmatprep.subr.mxu0 0.0
  %242 = vmatpush1.msra.mxu0 0.0
  %243 = vmatprep.subr.mxu0 0.0
  %244 = vmatpush1.msra.mxu0 0.0
  %245 = vmatprep.subr.mxu0 0.0
  %246 = vmatpush1.msra.mxu0 0.0
  %247 = vmatprep.mubr.f32.mxu0 0.0
  %248 = vmatmul.mubr.f32.gmra.mrb[0].mxu0 %v181
  %v249 = vpop.f32.mrb[0].mxu0
  %v250 = vadd.f32 0.0, %v249
  %v251 = vpop.f32.mrb[0].mxu0
  %252 = vdwg.mxu0
  %v253 = vadd.f32 %v179, %v250
  %v254 = vtanh.pop %v253
  %255 = vst.msk [vmem:[#allocation2 + $0x10] sm:$0xff] %vm21, %v254
  %v256 = vld [vmem:[%s0 + $0x18] sm:$0xff]
  %v258 = vsel %vm21, %v254, 0
  %260 = vmatprep.subr.mxu0 0.0
  %261 = vmatpush1.msra.mxu0 %v17
  %262 = vmatprep.subr.mxu0 0.0
  %263 = vmatpush1.msra.mxu0 %v18
  %264 = vmatprep.subr.mxu0 0.0
  %265 = vmatpush1.msra.mxu0 %v27
  %266 = vmatprep.subr.mxu0 0.0
  %267 = vmatpush1.msra.mxu0 0.0
  %268 = vmatprep.subr.mxu0 0.0
  %269 = vmatpush1.msra.mxu0 0.0
  %270 = vmatprep.subr.mxu0 0.0
  %271 = vmatpush1.msra.mxu0 0.0
  %272 = vmatprep.subr.mxu0 0.0
  %273 = vmatpush1.msra.mxu0 0.0
  %274 = vmatprep.subr.mxu0 0.0
  %275 = vmatpush1.msra.mxu0 0.0
  %276 = vmatprep.subr.mxu0 0.0
  %277 = vmatpush1.msra.mxu0 0.0
  %278 = vmatprep.subr.mxu0 0.0
  %279 = vmatpush1.msra.mxu0 0.0
  %280 = vmatprep.subr.mxu0 0.0
  %281 = vmatpush1.msra.mxu0 0.0
  %282 = vmatprep.subr.mxu0 0.0
  %283 = vmatpush1.msra.mxu0 0.0
  %284 = vmatprep.subr.mxu0 0.0
  %285 = vmatpush1.msra.mxu0 0.0
  %286 = vmatprep.subr.mxu0 0.0
  %287 = vmatpush1.msra.mxu0 0.0
  %288 = vmatprep.subr.mxu0 0.0
  %289 = vmatpush1.msra.mxu0 0.0
  %290 = vmatprep.subr.mxu0 0.0
  %291 = vmatpush1.msra.mxu0 0.0
  %292 = vmatprep.subr.mxu0 0.0
  %293 = vmatpush1.msra.mxu0 0.0
  %294 = vmatprep.subr.mxu0 0.0
  %295 = vmatpush1.msra.mxu0 0.0
  %296 = vmatprep.subr.mxu0 0.0
  %297 = vmatpush1.msra.mxu0 0.0
  %298 = vmatprep.subr.mxu0 0.0
  %299 = vmatpush1.msra.mxu0 0.0
  %300 = vmatprep.subr.mxu0 0.0
  %301 = vmatpush1.msra.mxu0 0.0
  %302 = vmatprep.subr.mxu0 0.0
  %303 = vmatpush1.msra.mxu0 0.0
  %304 = vmatprep.subr.mxu0 0.0
  %305 = vmatpush1.msra.mxu0 0.0
  %306 = vmatprep.subr.mxu0 0.0
  %307 = vmatpush1.msra.mxu0 0.0
  %308 = vmatprep.subr.mxu0 0.0
  %309 = vmatpush1.msra.mxu0 0.0
  %310 = vmatprep.subr.mxu0 0.0
  %311 = vmatpush1.msra.mxu0 0.0
  %312 = vmatprep.subr.mxu0 0.0
  %313 = vmatpush1.msra.mxu0 0.0
  %314 = vmatprep.subr.mxu0 0.0
  %315 = vmatpush1.msra.mxu0 0.0
  %316 = vmatprep.subr.mxu0 0.0
  %317 = vmatpush1.msra.mxu0 0.0
  %318 = vmatprep.subr.mxu0 0.0
  %319 = vmatpush1.msra.mxu0 0.0
  %320 = vmatprep.subr.mxu0 0.0
  %321 = vmatpush1.msra.mxu0 0.0
  %322 = vmatprep.subr.mxu0 0.0
  %323 = vmatpush1.msra.mxu0 0.0
  %324 = vmatprep.mubr.f32.mxu0 0.0
  %325 = vmatmul.mubr.f32.gmra.mrb[0].mxu0 %v258
  %v326 = vpop.f32.mrb[0].mxu0
  %v327 = vadd.f32 0.0, %v326
  %v328 = vpop.f32.mrb[0].mxu0
  %329 = vdwg.mxu0
  %v330 = vadd.f32 %v256, %v327
  %v331 = vtanh.pop %v330
  %332 = vst.msk [vmem:[#allocation2 + $0x18] sm:$0xff] %vm21, %v331
  %v333 = vld [vmem:[%s0 + $0x20] sm:$0xff]
  %v335 = vsel %vm21, %v331, 0
  %337 = vmatprep.subr.mxu0 0.0
  %338 = vmatpush1.msra.mxu0 %v17
  %339 = vmatprep.subr.mxu0 0.0
  %340 = vmatpush1.msra.mxu0 %v18
  %341 = vmatprep.subr.mxu0 0.0
  %342 = vmatpush1.msra.mxu0 %v27
  %343 = vmatprep.subr.mxu0 0.0
  %344 = vmatpush1.msra.mxu0 0.0
  %345 = vmatprep.subr.mxu0 0.0
  %346 = vmatpush1.msra.mxu0 0.0
  %347 = vmatprep.subr.mxu0 0.0
  %348 = vmatpush1.msra.mxu0 0.0
  %349 = vmatprep.subr.mxu0 0.0
  %350 = vmatpush1.msra.mxu0 0.0
  %351 = vmatprep.subr.mxu0 0.0
  %352 = vmatpush1.msra.mxu0 0.0
  %353 = vmatprep.subr.mxu0 0.0
  %354 = vmatpush1.msra.mxu0 0.0
  %355 = vmatprep.subr.mxu0 0.0
  %356 = vmatpush1.msra.mxu0 0.0
  %357 = vmatprep.subr.mxu0 0.0
  %358 = vmatpush1.msra.mxu0 0.0
  %359 = vmatprep.subr.mxu0 0.0
  %360 = vmatpush1.msra.mxu0 0.0
  %361 = vmatprep.subr.mxu0 0.0
  %362 = vmatpush1.msra.mxu0 0.0
  %363 = vmatprep.subr.mxu0 0.0
  %364 = vmatpush1.msra.mxu0 0.0
  %365 = vmatprep.subr.mxu0 0.0
  %366 = vmatpush1.msra.mxu0 0.0
  %367 = vmatprep.subr.mxu0 0.0
  %368 = vmatpush1.msra.mxu0 0.0
  %369 = vmatprep.subr.mxu0 0.0
  %370 = vmatpush1.msra.mxu0 0.0
  %371 = vmatprep.subr.mxu0 0.0
  %372 = vmatpush1.msra.mxu0 0.0
  %373 = vmatprep.subr.mxu0 0.0
  %374 = vmatpush1.msra.mxu0 0.0
  %375 = vmatprep.subr.mxu0 0.0
  %376 = vmatpush1.msra.mxu0 0.0
  %377 = vmatprep.subr.mxu0 0.0
  %378 = vmatpush1.msra.mxu0 0.0
  %379 = vmatprep.subr.mxu0 0.0
  %380 = vmatpush1.msra.mxu0 0.0
  %381 = vmatprep.subr.mxu0 0.0
  %382 = vmatpush1.msra.mxu0 0.0
  %383 = vmatprep.subr.mxu0 0.0
  %384 = vmatpush1.msra.mxu0 0.0
  %385 = vmatprep.subr.mxu0 0.0
  %386 = vmatpush1.msra.mxu0 0.0
  %387 = vmatprep.subr.mxu0 0.0
  %388 = vmatpush1.msra.mxu0 0.0
  %389 = vmatprep.subr.mxu0 0.0
  %390 = vmatpush1.msra.mxu0 0.0
  %391 = vmatprep.subr.mxu0 0.0
  %392 = vmatpush1.msra.mxu0 0.0
  %393 = vmatprep.subr.mxu0 0.0
  %394 = vmatpush1.msra.mxu0 0.0
  %395 = vmatprep.subr.mxu0 0.0
  %396 = vmatpush1.msra.mxu0 0.0
  %397 = vmatprep.subr.mxu0 0.0
  %398 = vmatpush1.msra.mxu0 0.0
  %399 = vmatprep.subr.mxu0 0.0
  %400 = vmatpush1.msra.mxu0 0.0
  %401 = vmatprep.mubr.f32.mxu0 0.0
  %402 = vmatmul.mubr.f32.gmra.mrb[0].mxu0 %v335
  %v403 = vpop.f32.mrb[0].mxu0
  %v404 = vadd.f32 0.0, %v403
  %v405 = vpop.f32.mrb[0].mxu0
  %406 = vdwg.mxu0
  %v407 = vadd.f32 %v333, %v404
  %v408 = vtanh.pop %v407
  %409 = vst.msk [vmem:[#allocation2 + $0x20] sm:$0xff] %vm21, %v408
  %v410 = vld [vmem:[%s0 + $0x28] sm:$0xff]
  %v412 = vsel %vm21, %v408, 0
  %414 = vmatprep.subr.mxu0 0.0
  %415 = vmatpush1.msra.mxu0 %v17
  %416 = vmatprep.subr.mxu0 0.0
  %417 = vmatpush1.msra.mxu0 %v18
  %418 = vmatprep.subr.mxu0 0.0
  %419 = vmatpush1.msra.mxu0 %v27
  %420 = vmatprep.subr.mxu0 0.0
  %421 = vmatpush1.msra.mxu0 0.0
  %422 = vmatprep.subr.mxu0 0.0
  %423 = vmatpush1.msra.mxu0 0.0
  %424 = vmatprep.subr.mxu0 0.0
  %425 = vmatpush1.msra.mxu0 0.0
  %426 = vmatprep.subr.mxu0 0.0
  %427 = vmatpush1.msra.mxu0 0.0
  %428 = vmatprep.subr.mxu0 0.0
  %429 = vmatpush1.msra.mxu0 0.0
  %430 = vmatprep.subr.mxu0 0.0
  %431 = vmatpush1.msra.mxu0 0.0
  %432 = vmatprep.subr.mxu0 0.0
  %433 = vmatpush1.msra.mxu0 0.0
  %434 = vmatprep.subr.mxu0 0.0
  %435 = vmatpush1.msra.mxu0 0.0
  %436 = vmatprep.subr.mxu0 0.0
  %437 = vmatpush1.msra.mxu0 0.0
  %438 = vmatprep.subr.mxu0 0.0
  %439 = vmatpush1.msra.mxu0 0.0
  %440 = vmatprep.subr.mxu0 0.0
  %441 = vmatpush1.msra.mxu0 0.0
  %442 = vmatprep.subr.mxu0 0.0
  %443 = vmatpush1.msra.mxu0 0.0
  %444 = vmatprep.subr.mxu0 0.0
  %445 = vmatpush1.msra.mxu0 0.0
  %446 = vmatprep.subr.mxu0 0.0
  %447 = vmatpush1.msra.mxu0 0.0
  %448 = vmatprep.subr.mxu0 0.0
  %449 = vmatpush1.msra.mxu0 0.0
  %450 = vmatprep.subr.mxu0 0.0
  %451 = vmatpush1.msra.mxu0 0.0
  %452 = vmatprep.subr.mxu0 0.0
  %453 = vmatpush1.msra.mxu0 0.0
  %454 = vmatprep.subr.mxu0 0.0
  %455 = vmatpush1.msra.mxu0 0.0
  %456 = vmatprep.subr.mxu0 0.0
  %457 = vmatpush1.msra.mxu0 0.0
  %458 = vmatprep.subr.mxu0 0.0
  %459 = vmatpush1.msra.mxu0 0.0
  %460 = vmatprep.subr.mxu0 0.0
  %461 = vmatpush1.msra.mxu0 0.0
  %462 = vmatprep.subr.mxu0 0.0
  %463 = vmatpush1.msra.mxu0 0.0
  %464 = vmatprep.subr.mxu0 0.0
  %465 = vmatpush1.msra.mxu0 0.0
  %466 = vmatprep.subr.mxu0 0.0
  %467 = vmatpush1.msra.mxu0 0.0
  %468 = vmatprep.subr.mxu0 0.0
  %469 = vmatpush1.msra.mxu0 0.0
  %470 = vmatprep.subr.mxu0 0.0
  %471 = vmatpush1.msra.mxu0 0.0
  %472 = vmatprep.subr.mxu0 0.0
  %473 = vmatpush1.msra.mxu0 0.0
  %474 = vmatprep.subr.mxu0 0.0
  %475 = vmatpush1.msra.mxu0 0.0
  %476 = vmatprep.subr.mxu0 0.0
  %477 = vmatpush1.msra.mxu0 0.0
  %478 = vmatprep.mubr.f32.mxu0 0.0
  %479 = vmatmul.mubr.f32.gmra.mrb[0].mxu0 %v412
  %v480 = vpop.f32.mrb[0].mxu0
  %v481 = vadd.f32 0.0, %v480
  %v482 = vpop.f32.mrb[0].mxu0
  %483 = vdwg.mxu0
  %v484 = vadd.f32 %v410, %v481
  %v485 = vtanh.pop %v484
  %486 = vst.msk [vmem:[#allocation2 + $0x28] sm:$0xff] %vm21, %v485
  %v487 = vld [vmem:[%s0 + $0x30] sm:$0xff]
  %v489 = vsel %vm21, %v485, 0
  %491 = vmatprep.subr.mxu0 0.0
  %492 = vmatpush1.msra.mxu0 %v17
  %493 = vmatprep.subr.mxu0 0.0
  %494 = vmatpush1.msra.mxu0 %v18
  %495 = vmatprep.subr.mxu0 0.0
  %496 = vmatpush1.msra.mxu0 %v27
  %497 = vmatprep.subr.mxu0 0.0
  %498 = vmatpush1.msra.mxu0 0.0
  %499 = vmatprep.subr.mxu0 0.0
  %500 = vmatpush1.msra.mxu0 0.0
  %501 = vmatprep.subr.mxu0 0.0
  %502 = vmatpush1.msra.mxu0 0.0
  %503 = vmatprep.subr.mxu0 0.0
  %504 = vmatpush1.msra.mxu0 0.0
  %505 = vmatprep.subr.mxu0 0.0
  %506 = vmatpush1.msra.mxu0 0.0
  %507 = vmatprep.subr.mxu0 0.0
  %508 = vmatpush1.msra.mxu0 0.0
  %509 = vmatprep.subr.mxu0 0.0
  %510 = vmatpush1.msra.mxu0 0.0
  %511 = vmatprep.subr.mxu0 0.0
  %512 = vmatpush1.msra.mxu0 0.0
  %513 = vmatprep.subr.mxu0 0.0
  %514 = vmatpush1.msra.mxu0 0.0
  %515 = vmatprep.subr.mxu0 0.0
  %516 = vmatpush1.msra.mxu0 0.0
  %517 = vmatprep.subr.mxu0 0.0
  %518 = vmatpush1.msra.mxu0 0.0
  %519 = vmatprep.subr.mxu0 0.0
  %520 = vmatpush1.msra.mxu0 0.0
  %521 = vmatprep.subr.mxu0 0.0
  %522 = vmatpush1.msra.mxu0 0.0
  %523 = vmatprep.subr.mxu0 0.0
  %524 = vmatpush1.msra.mxu0 0.0
  %525 = vmatprep.subr.mxu0 0.0
  %526 = vmatpush1.msra.mxu0 0.0
  %527 = vmatprep.subr.mxu0 0.0
  %528 = vmatpush1.msra.mxu0 0.0
  %529 = vmatprep.subr.mxu0 0.0
  %530 = vmatpush1.msra.mxu0 0.0
  %531 = vmatprep.subr.mxu0 0.0
  %532 = vmatpush1.msra.mxu0 0.0
  %533 = vmatprep.subr.mxu0 0.0
  %534 = vmatpush1.msra.mxu0 0.0
  %535 = vmatprep.subr.mxu0 0.0
  %536 = vmatpush1.msra.mxu0 0.0
  %537 = vmatprep.subr.mxu0 0.0
  %538 = vmatpush1.msra.mxu0 0.0
  %539 = vmatprep.subr.mxu0 0.0
  %540 = vmatpush1.msra.mxu0 0.0
  %541 = vmatprep.subr.mxu0 0.0
  %542 = vmatpush1.msra.mxu0 0.0
  %543 = vmatprep.subr.mxu0 0.0
  %544 = vmatpush1.msra.mxu0 0.0
  %545 = vmatprep.subr.mxu0 0.0
  %546 = vmatpush1.msra.mxu0 0.0
  %547 = vmatprep.subr.mxu0 0.0
  %548 = vmatpush1.msra.mxu0 0.0
  %549 = vmatprep.subr.mxu0 0.0
  %550 = vmatpush1.msra.mxu0 0.0
  %551 = vmatprep.subr.mxu0 0.0
  %552 = vmatpush1.msra.mxu0 0.0
  %553 = vmatprep.subr.mxu0 0.0
  %554 = vmatpush1.msra.mxu0 0.0
  %555 = vmatprep.mubr.f32.mxu0 0.0
  %556 = vmatmul.mubr.f32.gmra.mrb[0].mxu0 %v489
  %v557 = vpop.f32.mrb[0].mxu0
  %v558 = vadd.f32 0.0, %v557
  %v559 = vpop.f32.mrb[0].mxu0
  %560 = vdwg.mxu0
  %v561 = vadd.f32 %v487, %v558
  %v562 = vtanh.pop %v561
  %563 = vst.msk [vmem:[#allocation2 + $0x30] sm:$0xff] %vm21, %v562
  %v564 = vld [vmem:[%s0 + $0x38] sm:$0xff]
  %v566 = vsel %vm21, %v562, 0
  %568 = vmatprep.subr.mxu0 0.0
  %569 = vmatpush1.msra.mxu0 %v17
  %570 = vmatprep.subr.mxu0 0.0
  %571 = vmatpush1.msra.mxu0 %v18
  %572 = vmatprep.subr.mxu0 0.0
  %573 = vmatpush1.msra.mxu0 %v27
  %574 = vmatprep.subr.mxu0 0.0
  %575 = vmatpush1.msra.mxu0 0.0
  %576 = vmatprep.subr.mxu0 0.0
  %577 = vmatpush1.msra.mxu0 0.0
  %578 = vmatprep.subr.mxu0 0.0
  %579 = vmatpush1.msra.mxu0 0.0
  %580 = vmatprep.subr.mxu0 0.0
  %581 = vmatpush1.msra.mxu0 0.0
  %582 = vmatprep.subr.mxu0 0.0
  %583 = vmatpush1.msra.mxu0 0.0
  %584 = vmatprep.subr.mxu0 0.0
  %585 = vmatpush1.msra.mxu0 0.0
  %586 = vmatprep.subr.mxu0 0.0
  %587 = vmatpush1.msra.mxu0 0.0
  %588 = vmatprep.subr.mxu0 0.0
  %589 = vmatpush1.msra.mxu0 0.0
  %590 = vmatprep.subr.mxu0 0.0
  %591 = vmatpush1.msra.mxu0 0.0
  %592 = vmatprep.subr.mxu0 0.0
  %593 = vmatpush1.msra.mxu0 0.0
  %594 = vmatprep.subr.mxu0 0.0
  %595 = vmatpush1.msra.mxu0 0.0
  %596 = vmatprep.subr.mxu0 0.0
  %597 = vmatpush1.msra.mxu0 0.0
  %598 = vmatprep.subr.mxu0 0.0
  %599 = vmatpush1.msra.mxu0 0.0
  %600 = vmatprep.subr.mxu0 0.0
  %601 = vmatpush1.msra.mxu0 0.0
  %602 = vmatprep.subr.mxu0 0.0
  %603 = vmatpush1.msra.mxu0 0.0
  %604 = vmatprep.subr.mxu0 0.0
  %605 = vmatpush1.msra.mxu0 0.0
  %606 = vmatprep.subr.mxu0 0.0
  %607 = vmatpush1.msra.mxu0 0.0
  %608 = vmatprep.subr.mxu0 0.0
  %609 = vmatpush1.msra.mxu0 0.0
  %610 = vmatprep.subr.mxu0 0.0
  %611 = vmatpush1.msra.mxu0 0.0
  %612 = vmatprep.subr.mxu0 0.0
  %613 = vmatpush1.msra.mxu0 0.0
  %614 = vmatprep.subr.mxu0 0.0
  %615 = vmatpush1.msra.mxu0 0.0
  %616 = vmatprep.subr.mxu0 0.0
  %617 = vmatpush1.msra.mxu0 0.0
  %618 = vmatprep.subr.mxu0 0.0
  %619 = vmatpush1.msra.mxu0 0.0
  %620 = vmatprep.subr.mxu0 0.0
  %621 = vmatpush1.msra.mxu0 0.0
  %622 = vmatprep.subr.mxu0 0.0
  %623 = vmatpush1.msra.mxu0 0.0
  %624 = vmatprep.subr.mxu0 0.0
  %625 = vmatpush1.msra.mxu0 0.0
  %626 = vmatprep.subr.mxu0 0.0
  %627 = vmatpush1.msra.mxu0 0.0
  %628 = vmatprep.subr.mxu0 0.0
  %629 = vmatpush1.msra.mxu0 0.0
  %630 = vmatprep.subr.mxu0 0.0
  %631 = vmatpush1.msra.mxu0 0.0
  %632 = vmatprep.mubr.f32.mxu0 0.0
  %633 = vmatmul.mubr.f32.gmra.mrb[0].mxu0 %v566
  %v634 = vpop.f32.mrb[0].mxu0
  %v635 = vadd.f32 0.0, %v634
  %v636 = vpop.f32.mrb[0].mxu0
  %637 = vdwg.mxu0
  %v638 = vadd.f32 %v564, %v635
  %v639 = vtanh.pop %v638
  %640 = vst.msk [vmem:[#allocation2 + $0x38] sm:$0xff] %vm21, %v639
  %v641 = vld [vmem:[#allocation2] sm:$0xff]
  %v642 = vld [vmem:[#allocation2 + $0x8] sm:$0xff]
  %v643 = vld [vmem:[#allocation2 + $0x10] sm:$0xff]
  %v644 = vld [vmem:[#allocation2 + $0x18] sm:$0xff]
  %v645 = vld [vmem:[#allocation2 + $0x20] sm:$0xff]
  %v646 = vld [vmem:[#allocation2 + $0x28] sm:$0xff]
  %v647 = vld [vmem:[#allocation2 + $0x30] sm:$0xff]
  %v648 = vld [vmem:[#allocation2 + $0x38] sm:$0xff]
  %v649 = vld [vmem:[%s2] sm:$0xff]
  %v650 = vld [vmem:[%s2 + $0x8] sm:$0xff]
  %v651 = vld [vmem:[%s2 + $0x10] sm:$0xf]
  %v652 = vld [vmem:[%s3] sm:$0x1]
  %v654 = vlaneseq
  %v655 = vshrl.u32 %v654, 7
  %v656 = vsub.s32 0, %v655
  %v657 = vrot.slane %v652, %v656
  %v660 = vsel %vm21, %v641, 0
  %v663 = vsel %vm21, %v642, 0
  %v666 = vsel %vm21, %v643, 0
  %v669 = vsel %vm21, %v644, 0
  %v672 = vsel %vm21, %v645, 0
  %v675 = vsel %vm21, %v646, 0
  %v678 = vsel %vm21, %v647, 0
  %v681 = vsel %vm21, %v648, 0
  %v684 = vsel %vm25, %v651, 0
  %686 = vmatprep.subr.mxu0 0.0
  %687 = vmatpush1.msra.mxu0 %v649
  %688 = vmatprep.subr.mxu0 0.0
  %689 = vmatpush1.msra.mxu0 %v650
  %690 = vmatprep.subr.mxu0 0.0
  %691 = vmatpush1.msra.mxu0 %v684
  %692 = vmatprep.subr.mxu0 0.0
  %693 = vmatpush1.msra.mxu0 0.0
  %694 = vmatprep.subr.mxu0 0.0
  %695 = vmatpush1.msra.mxu0 0.0
  %696 = vmatprep.subr.mxu0 0.0
  %697 = vmatpush1.msra.mxu0 0.0
  %698 = vmatprep.subr.mxu0 0.0
  %699 = vmatpush1.msra.mxu0 0.0
  %700 = vmatprep.subr.mxu0 0.0
  %701 = vmatpush1.msra.mxu0 0.0
  %702 = vmatprep.subr.mxu0 0.0
  %703 = vmatpush1.msra.mxu0 0.0
  %704 = vmatprep.subr.mxu0 0.0
  %705 = vmatpush1.msra.mxu0 0.0
  %706 = vmatprep.subr.mxu0 0.0
  %707 = vmatpush1.msra.mxu0 0.0
  %708 = vmatprep.subr.mxu0 0.0
  %709 = vmatpush1.msra.mxu0 0.0
  %710 = vmatprep.subr.mxu0 0.0
  %711 = vmatpush1.msra.mxu0 0.0
  %712 = vmatprep.subr.mxu0 0.0
  %713 = vmatpush1.msra.mxu0 0.0
  %714 = vmatprep.subr.mxu0 0.0
  %715 = vmatpush1.msra.mxu0 0.0
  %716 = vmatprep.subr.mxu0 0.0
  %717 = vmatpush1.msra.mxu0 0.0
  %718 = vmatprep.subr.mxu0 0.0
  %719 = vmatpush1.msra.mxu0 0.0
  %720 = vmatprep.subr.mxu0 0.0
  %721 = vmatpush1.msra.mxu0 0.0
  %722 = vmatprep.subr.mxu0 0.0
  %723 = vmatpush1.msra.mxu0 0.0
  %724 = vmatprep.subr.mxu0 0.0
  %725 = vmatpush1.msra.mxu0 0.0
  %726 = vmatprep.subr.mxu0 0.0
  %727 = vmatpush1.msra.mxu0 0.0
  %728 = vmatprep.subr.mxu0 0.0
  %729 = vmatpush1.msra.mxu0 0.0
  %730 = vmatprep.subr.mxu0 0.0
  %731 = vmatpush1.msra.mxu0 0.0
  %732 = vmatprep.subr.mxu0 0.0
  %733 = vmatpush1.msra.mxu0 0.0
  %734 = vmatprep.subr.mxu0 0.0
  %735 = vmatpush1.msra.mxu0 0.0
  %736 = vmatprep.subr.mxu0 0.0
  %737 = vmatpush1.msra.mxu0 0.0
  %738 = vmatprep.subr.mxu0 0.0
  %739 = vmatpush1.msra.mxu0 0.0
  %740 = vmatprep.subr.mxu0 0.0
  %741 = vmatpush1.msra.mxu0 0.0
  %742 = vmatprep.subr.mxu0 0.0
  %743 = vmatpush1.msra.mxu0 0.0
  %744 = vmatprep.subr.mxu0 0.0
  %745 = vmatpush1.msra.mxu0 0.0
  %746 = vmatprep.subr.mxu0 0.0
  %747 = vmatpush1.msra.mxu0 0.0
  %748 = vmatprep.subr.mxu0 0.0
  %749 = vmatpush1.msra.mxu0 0.0
  %750 = vmatprep.mubr.f32.mxu0 0.0
  %751 = vmatmul.mubr.f32.gmra.mrb[0].mxu0 %v660
  %v752 = vpop.f32.mrb[0].mxu0
  %v753 = vadd.f32 %v657, %v752
  %v754 = vpop.f32.mrb[0].mxu0
  %755 = vmatprep.mubr.f32.mxu0 0.0
  %756 = vmatmul.mubr.f32.gmra.mrb[0].mxu0 %v663
  %v757 = vpop.f32.mrb[0].mxu0
  %v758 = vadd.f32 %v657, %v757
  %v759 = vpop.f32.mrb[0].mxu0
  %760 = vmatprep.mubr.f32.mxu0 0.0
  %761 = vmatmul.mubr.f32.gmra.mrb[0].mxu0 %v666
  %v762 = vpop.f32.mrb[0].mxu0
  %v763 = vadd.f32 %v657, %v762
  %v764 = vpop.f32.mrb[0].mxu0
  %765 = vmatprep.mubr.f32.mxu0 0.0
  %766 = vmatmul.mubr.f32.gmra.mrb[0].mxu0 %v669
  %v767 = vpop.f32.mrb[0].mxu0
  %v768 = vadd.f32 %v657, %v767
  %v769 = vpop.f32.mrb[0].mxu0
  %770 = vmatprep.mubr.f32.mxu0 0.0
  %771 = vmatmul.mubr.f32.gmra.mrb[0].mxu0 %v672
  %v772 = vpop.f32.mrb[0].mxu0
  %v773 = vadd.f32 %v657, %v772
  %v774 = vpop.f32.mrb[0].mxu0
  %775 = vmatprep.mubr.f32.mxu0 0.0
  %776 = vmatmul.mubr.f32.gmra.mrb[0].mxu0 %v675
  %v777 = vpop.f32.mrb[0].mxu0
  %v778 = vadd.f32 %v657, %v777
  %v779 = vpop.f32.mrb[0].mxu0
  %780 = vmatprep.mubr.f32.mxu0 0.0
  %781 = vmatmul.mubr.f32.gmra.mrb[0].mxu0 %v678
  %v782 = vpop.f32.mrb[0].mxu0
  %v783 = vadd.f32 %v657, %v782
  %v784 = vpop.f32.mrb[0].mxu0
  %785 = vmatprep.mubr.f32.mxu0 0.0
  %786 = vmatmul.mubr.f32.gmra.mrb[0].mxu0 %v681
  %v787 = vpop.f32.mrb[0].mxu0
  %v788 = vadd.f32 %v657, %v787
  %v789 = vpop.f32.mrb[0].mxu0
  %790 = vdwg.mxu0
  %vm791 = vcmask 39936
  %792 = vst.msk [vmem:[%s4] sm:$0xff] %vm791, %v753
  %793 = vst.msk [vmem:[%s4 + $0x8] sm:$0xff] %vm791, %v758
  %794 = vst.msk [vmem:[%s4 + $0x10] sm:$0xff] %vm791, %v763
  %795 = vst.msk [vmem:[%s4 + $0x18] sm:$0xff] %vm791, %v768
  %796 = vst.msk [vmem:[%s4 + $0x20] sm:$0xff] %vm791, %v773
  %797 = vst.msk [vmem:[%s4 + $0x28] sm:$0xff] %vm791, %v778
  %798 = vst.msk [vmem:[%s4 + $0x30] sm:$0xff] %vm791, %v783
  %799 = vst.msk [vmem:[%s4 + $0x38] sm:$0xff] %vm791, %v788
  // Predicated region
  $region18: #{tpu_custom_call.1} parent=0 // pred_check
    _
  $region19: #{tpu_custom_call.1} parent=0 // pred_check_branch
    %801 = sbr.rel (0) target = $region21
  $region20: #{tpu_custom_call.1} parent=0 // pred_region
    _
  $region21: #{tpu_custom_call.1} parent=0 // pred_fallthru
    _
  // Predicated region
  $region22: #{tpu_custom_call.1} parent=0 // pred_check
    _
  $region23: #{tpu_custom_call.1} parent=0 // pred_check_branch
    %803 = sbr.rel (0) target = $region25
  $region24: #{tpu_custom_call.1} parent=0 // pred_region
    _
  $region25: #{tpu_custom_call.1} parent=0 // pred_fallthru
    _

</llo_original>
